<compile_context>
chip_gen: v7x
topology: tpu7x:2x2x1
jax: 0.10.0
libtpu: 0.0.40
codegen_flags: <defaults>
</compile_context>

<pallas_src>
import functools
import math

import jax
import jax.numpy as jnp
from jax import lax
from jax.experimental import pallas as pl
from jax.experimental.pallas import tpu as pltpu


def _round_up(v: int, m: int) -> int:
    return ((v + m - 1) // m) * m


def _cdiv(a: int, b: int) -> int:
    return (a + b - 1) // b


@functools.lru_cache(maxsize=1)
def _vmem_budget():
    """(tiling budget, vmem_limit_bytes) chosen from the chip's physical VMEM."""
    cap = 64 * 1024 * 1024                      # conservative default (v7x per-TC)
    try:
        info = pltpu.get_tpu_info()
        for attr in ("vmem_capacity_bytes", "vmem_size_bytes", "vmem_bytes"):
            val = getattr(info, attr, None)
            if val:
                cap = int(val)
                break
    except Exception:
        pass
    if cap <= 64 * 1024 * 1024:                 # v7x: 64 MiB physical per TC
        return 44 * 1024 * 1024, 48 * 1024 * 1024
    return 96 * 1024 * 1024, 100 * 1024 * 1024  # v5e / v6e: 128 MiB physical


# --------------------------- kernels ---------------------------------------


def _energy_mlp_kernel(x_ref, off_ref, w_ref, b_ref, y_ref, h_ref, *, rb, nrb):
    # W and bias are VMEM-resident across grid steps (constant index_map).
    w = w_ref[...]                                    # (C, C)
    b = b_ref[...]                                    # (1, C)

    def rows(r, carry):
        row0 = pl.multiple_of(r * rb, rb)
        xs = x_ref[pl.ds(row0, rb), :]                # (rb, C)
        # F.linear(x, W, offset + bias) = x @ W.T + offset + bias.
        # Contract dim 1 of BOTH operands (same dimension numbers as the
        # q @ k^T step of flash attention) -> the MXU consumes W directly,
        # no materialized transpose.
        pre = lax.dot_general(
            xs, w, dimension_numbers=(((1,), (1,)), ((), ())),
            preferred_element_type=jnp.float32)
        pre = pre + off_ref[pl.ds(row0, rb), :] + b
        hs = jnp.tanh(pre).astype(h_ref.dtype)        # storage dtype feeds the MXU
        h_ref[pl.ds(row0, rb), :] = hs
        # F.linear(h, W.T) = h @ W  (standard contraction).
        ys = jnp.dot(hs, w, preferred_element_type=jnp.float32)
        y_ref[pl.ds(row0, rb), :] = ys.astype(y_ref.dtype)
        return carry

    if nrb == 1:
        rows(0, 0)
    else:
        lax.fori_loop(0, nrb, rows, 0, unroll=True)


def _energy_mlp_tiled_kernel(x_ref, off_ref, w_ref, b_ref, y_ref, h_ref, acc_ref):
    # Large-C path: grid = (batch tiles, W row-blocks); W streams over axis 1.
    j = pl.program_id(1)

    x = x_ref[...]                                    # (TM, Cp)
    w = w_ref[...]                                    # (TJ, Cp): rows j_blk of W
    pre = lax.dot_general(
        x, w, dimension_numbers=(((1,), (1,)), ((), ())),
        preferred_element_type=jnp.float32)           # (TM, TJ)
    pre = pre + off_ref[...] + b_ref[...]
    hs = jnp.tanh(pre).astype(h_ref.dtype)
    h_ref[...] = hs

    @pl.when(j == 0)
    def _():
        acc_ref[...] = jnp.zeros_like(acc_ref)

    acc_ref[...] += jnp.dot(hs, w, preferred_element_type=jnp.float32)

    @pl.when(j == pl.num_programs(1) - 1)
    def _():
        y_ref[...] = acc_ref[...].astype(y_ref.dtype)


# --------------------------- wrapper ----------------------------------------


@functools.partial(
    jax.jit,
    static_argnames=("block_rows", "force_feature_tiling", "feature_block",
                     "single_buffer_resident"))
def energy_mlp(x, offset, W, bias=None, *, block_rows=1024,
               force_feature_tiling=False, feature_block=None,
               single_buffer_resident=True):
    """x: (N, C), offset: (N, C), W: (C, C), bias: (C,) -> (y, h), each (N, C)."""
    N, C = x.shape
    if bias is None:
        bias = jnp.zeros((C,), x.dtype)
    bias2d = bias.reshape(1, C)
    itemsize = jnp.dtype(x.dtype).itemsize

    budget, vmem_limit = _vmem_budget()

    # Lane/sublane-padded byte accounting (Mosaic pads VMEM buffers internally
    # even though the data in HBM is never padded).
    Cl = _round_up(C, 128)
    Cs = _round_up(C, 8)
    w_bufs = 1 if single_buffer_resident else 2

    def mono_vmem(tm):
        streams = 4 * 2 * tm * Cl * itemsize            # x, offset, y, h (2-deep)
        resident = w_bufs * (Cs * Cl + Cl) * itemsize    # W + bias
        scratch = 3 * min(tm, 256) * Cl * 4              # f32 sub-block temporaries
        return streams + resident + scratch

    # Row tile: >=2 grid steps for mid/large N (so the "parallel" axis can be
    # sharded across TensorCores), multiples of 256 to keep the MXU full.
    if N <= 256:
        TM = N if N < 8 else max(8, (min(N, block_rows) // 8) * 8)
    else:
        TM = min(block_rows, _round_up(_cdiv(N, 2), 256))
        TM = max(256, (TM // 256) * 256)

    def shrink_rows(tm):
        tm //= 2
        if tm >= 256:
            return (tm // 256) * 256
        return max(8, (tm // 8) * 8)

    while TM > 8 and mono_vmem(TM) > budget:
        TM = shrink_rows(TM)

    use_tiled = (force_feature_tiling
                 or mono_vmem(TM) > budget
                 or (TM < 64 and N >= 64))

    cost = pl.CostEstimate(
        flops=4 * N * C * C,                 # two N x C x C matmuls
        transcendentals=N * C,               # tanh
        bytes_accessed=(4 * N * C + C * C + C) * itemsize)

    if not use_tiled:
        rb = TM if TM < 256 else 256
        nrb = TM // rb
        grid = (_cdiv(N, TM),)

        stream_spec = pl.BlockSpec((TM, C), lambda i: (i, 0))
        if single_buffer_resident:
            # Constant index_map -> the default second pipeline buffer is waste.
            w_spec = pl.BlockSpec((C, C), lambda i: (0, 0),
                                  pipeline_mode=pl.Buffered(1))
            b_spec = pl.BlockSpec((1, C), lambda i: (0, 0),
                                  pipeline_mode=pl.Buffered(1))
        else:
            w_spec = pl.BlockSpec((C, C), lambda i: (0, 0))
            b_spec = pl.BlockSpec((1, C), lambda i: (0, 0))

        y, h = pl.pallas_call(
            functools.partial(_energy_mlp_kernel, rb=rb, nrb=nrb),
            out_shape=(jax.ShapeDtypeStruct((N, C), x.dtype),
                       jax.ShapeDtypeStruct((N, C), x.dtype)),
            grid_spec=pltpu.PrefetchScalarGridSpec(
                num_scalar_prefetch=0,
                grid=grid,
                in_specs=[stream_spec, stream_spec, w_spec, b_spec],
                out_specs=[stream_spec, stream_spec]),
            compiler_params=pltpu.CompilerParams(
                dimension_semantics=("parallel",),
                vmem_limit_bytes=vmem_limit),
            cost_estimate=cost,
        )(x, offset, W, bias2d)
        return y, h

    # ---- Large-C fallback: stream W row-blocks over an "arbitrary" axis ----
    TJ = feature_block if feature_block is not None else 256
    TJ = max(128, _round_up(TJ, 128))
    Cp = _round_up(max(C, TJ), TJ)
    if N <= 256:
        TMt = N if N < 8 else max(8, (N // 8) * 8)
    else:
        TMt = 256

    def tiled_vmem(tm, tj, cp):
        return ((2 * tm * cp + 2 * tj * cp + 2 * tm * tj       # x, W, offset
                 + 2 * tm * tj + 2 * tm * cp) * itemsize        # h, y
                + tm * cp * 4)                                  # f32 accumulator

    while tiled_vmem(TMt, TJ, Cp) > budget and (TMt > 64 or TJ > 128):
        if TJ > 128:
            TJ //= 2
            Cp = _round_up(max(C, TJ), TJ)
        else:
            TMt = max(64, ((TMt // 2) // 8) * 8)
    # TODO(synk): for C so large that even a (TMt, Cp) f32 accumulator does not
    # fit in VMEM, the contraction dim of the first matmul needs tiling too.

    pad_c = Cp - C
    if pad_c:   # zero padding is mathematically exact for both matmuls
        xt = jnp.pad(x, ((0, 0), (0, pad_c)))
        offt = jnp.pad(offset, ((0, 0), (0, pad_c)))
        Wt = jnp.pad(W, ((0, pad_c), (0, pad_c)))
        bt = jnp.pad(bias2d, ((0, 0), (0, pad_c)))
    else:
        xt, offt, Wt, bt = x, offset, W, bias2d

    grid = (_cdiv(N, TMt), Cp // TJ)

    yt, ht = pl.pallas_call(
        _energy_mlp_tiled_kernel,
        out_shape=(jax.ShapeDtypeStruct((N, Cp), x.dtype),
                   jax.ShapeDtypeStruct((N, Cp), x.dtype)),
        grid_spec=pltpu.PrefetchScalarGridSpec(
            num_scalar_prefetch=0,
            grid=grid,
            in_specs=[pl.BlockSpec((TMt, Cp), lambda i, j: (i, 0)),
                      pl.BlockSpec((TMt, TJ), lambda i, j: (i, j)),
                      pl.BlockSpec((TJ, Cp), lambda i, j: (j, 0)),
                      pl.BlockSpec((1, TJ), lambda i, j: (0, j))],
            out_specs=[pl.BlockSpec((TMt, Cp), lambda i, j: (i, 0)),
                       pl.BlockSpec((TMt, TJ), lambda i, j: (i, j))],
            scratch_shapes=[pltpu.VMEM((TMt, Cp), jnp.float32)]),
        compiler_params=pltpu.CompilerParams(
            dimension_semantics=("parallel", "arbitrary"),
            vmem_limit_bytes=vmem_limit),
        cost_estimate=cost,
    )(xt, offt, Wt, bt)

    if pad_c:
        return yt[:, :C], ht[:, :C]
    return yt, ht


# --------------------------- init & test ------------------------------------


def init_params(key, in_channels, dtype=jnp.float32):
    """Deterministic init matching nn.init.kaiming_uniform_(a=sqrt(5)) + bias."""
    kw, kb = jax.random.split(key)
    fan_in = in_channels
    w_bound = math.sqrt(1.0 / fan_in)           # kaiming_uniform with a=sqrt(5)
    W = jax.random.uniform(kw, (in_channels, in_channels), dtype,
                           minval=-w_bound, maxval=w_bound)
    b_bound = 1.0 / math.sqrt(fan_in)
    bias = jax.random.uniform(kb, (in_channels,), dtype,
                              minval=-b_bound, maxval=b_bound)
    return W, bias


if __name__ == "__main__":
    key = jax.random.PRNGKey(0)
    keys = jax.random.split(key, 9)

    HIGH = jax.lax.Precision.HIGHEST

    def reference(x, offset, W, bias):
        h = jnp.tanh(jnp.dot(x, W.T, precision=HIGH) + offset + bias)
        y = jnp.dot(h, W, precision=HIGH)
        return y, h

    # --- primary small case: N nodes x C channels (module's in_channels) ----
    N, C = 16, 32
    x = jax.random.normal(keys[0], (N, C), jnp.float32)
    offset = jax.random.normal(keys[1], (N, C), jnp.float32)
    W, bias = init_params(keys[2], C)

    try:
        y, h = energy_mlp(x, offset, W, bias)
        sbuf = True
    except Exception:
        # Fallback for jax versions without BlockSpec(pipeline_mode=...).
        sbuf = False
        y, h = energy_mlp(x, offset, W, bias, single_buffer_resident=False)
    jax.block_until_ready((y, h))

    y_ref, h_ref = reference(x, offset, W, bias)
    assert y.shape == (N, C) and h.shape == (N, C)
    assert jnp.allclose(h, h_ref, atol=1e-5, rtol=1e-5)
    assert jnp.allclose(y, y_ref, atol=1e-5, rtol=1e-5)

    # --- multi-step batch grid + unrolled row sub-blocks (still small) ------
    N2, C2 = 1024, 128
    x2 = jax.random.normal(keys[3], (N2, C2), jnp.float32)
    off2 = jax.random.normal(keys[4], (N2, C2), jnp.float32)
    W2, b2 = init_params(keys[5], C2)
    y2, h2 = energy_mlp(x2, off2, W2, b2, single_buffer_resident=sbuf)
    jax.block_until_ready((y2, h2))
    y2_ref, h2_ref = reference(x2, off2, W2, b2)
    assert jnp.allclose(h2, h2_ref, atol=1e-4, rtol=1e-4)
    assert jnp.allclose(y2, y2_ref, atol=1e-4, rtol=1e-4)

    # --- exercise the large-C feature-tiled fallback on small shapes --------
    N3, C3 = 64, 256
    x3 = jax.random.normal(keys[6], (N3, C3), jnp.float32)
    off3 = jax.random.normal(keys[7], (N3, C3), jnp.float32)
    W3, b3 = init_params(keys[8], C3)
    y3, h3 = energy_mlp(x3, off3, W3, b3, force_feature_tiling=True,
                        feature_block=128)
    jax.block_until_ready((y3, h3))
    y3_ref, h3_ref = reference(x3, off3, W3, b3)
    assert jnp.allclose(h3, h3_ref, atol=1e-4, rtol=1e-4)
    assert jnp.allclose(y3, y3_ref, atol=1e-4, rtol=1e-4)

    print("KERNEL_OK")
</pallas_src>

<mosaic_0001>
module attributes {stable_mosaic.version = 11 : i64} {
  func.func @_energy_mlp_kernel(%arg0: i32, %arg1: memref<16x32xf32, #tpu.memory_space<vmem>>, %arg2: memref<16x32xf32, #tpu.memory_space<vmem>>, %arg3: memref<32x32xf32, #tpu.memory_space<vmem>>, %arg4: memref<1x32xf32, #tpu.memory_space<vmem>>, %arg5: memref<16x32xf32, #tpu.memory_space<vmem>>, %arg6: memref<16x32xf32, #tpu.memory_space<vmem>>) attributes {dimension_semantics = [#tpu.dimension_semantics<parallel>], iteration_bounds = array<i64: 1>, scalar_prefetch = 0 : i64, scratch_operands = 0 : i64, tpu.core_type = #tpu.core_type<tc>, window_params = [{transform_indices = @transform_0, window_bounds = array<i64: 16, 32>}, {transform_indices = @transform_1, window_bounds = array<i64: 16, 32>}, {pipeline_mode = #tpu.pipeline_mode<synchronous>, transform_indices = @transform_2, window_bounds = array<i64: 32, 32>}, {pipeline_mode = #tpu.pipeline_mode<synchronous>, transform_indices = @transform_3, window_bounds = array<i64: 1, 32>}, {transform_indices = @transform_4, window_bounds = array<i64: 16, 32>}, {transform_indices = @transform_5, window_bounds = array<i64: 16, 32>}]} {
    %c0 = arith.constant 0 : index
    %c0_0 = arith.constant 0 : index
    %0 = vector.load %arg3[%c0, %c0_0] : memref<32x32xf32, #tpu.memory_space<vmem>>, vector<32x32xf32>
    %c0_1 = arith.constant 0 : index
    %c0_2 = arith.constant 0 : index
    %1 = vector.load %arg4[%c0_1, %c0_2] : memref<1x32xf32, #tpu.memory_space<vmem>>, vector<1x32xf32>
    %c0_i32 = arith.constant 0 : i32
    %2 = tpu.assume_multiple %c0_i32, 16 : i32
    %3 = arith.index_cast %2 : i32 to index
    %c0_3 = arith.constant 0 : index
    %4 = vector.load %arg1[%3, %c0_3] : memref<16x32xf32, #tpu.memory_space<vmem>>, vector<16x32xf32>
    %cst = arith.constant dense<0.000000e+00> : vector<16x32xf32>
    %5 = tpu.matmul %4, %0, %cst {dimension_numbers = #tpu.dot_dimension_numbers<[1], [1], [0], [0], [0, 0, 1, 0], [], []>} : vector<16x32xf32>, vector<32x32xf32>, vector<16x32xf32> -> vector<16x32xf32>
    %6 = arith.index_cast %2 : i32 to index
    %c0_4 = arith.constant 0 : index
    %7 = vector.load %arg2[%6, %c0_4] : memref<16x32xf32, #tpu.memory_space<vmem>>, vector<16x32xf32>
    %8 = arith.addf %5, %7 : vector<16x32xf32>
    %9 = vector.broadcast %1 : vector<1x32xf32> to vector<16x32xf32>
    %10 = arith.addf %8, %9 : vector<16x32xf32>
    %11 = math.tanh %10 : vector<16x32xf32>
    %12 = arith.index_cast %2 : i32 to index
    %c0_5 = arith.constant 0 : index
    %13 = vector.load %arg6[%12, %c0_5] : memref<16x32xf32, #tpu.memory_space<vmem>>, vector<16x32xf32>
    tpu.vector_store %arg6[%12, %c0_5], %11 {strides = array<i32>} : memref<16x32xf32, #tpu.memory_space<vmem>>, vector<16x32xf32>,
    %cst_6 = arith.constant dense<0.000000e+00> : vector<16x32xf32>
    %14 = tpu.matmul %11, %0, %cst_6 {dimension_numbers = #tpu.dot_dimension_numbers<[1], [0], [0], [1], [0, 0, 1, 1], [], []>} : vector<16x32xf32>, vector<32x32xf32>, vector<16x32xf32> -> vector<16x32xf32>
    %15 = arith.index_cast %2 : i32 to index
    %c0_7 = arith.constant 0 : index
    %16 = vector.load %arg5[%15, %c0_7] : memref<16x32xf32, #tpu.memory_space<vmem>>, vector<16x32xf32>
    tpu.vector_store %arg5[%15, %c0_7], %14 {strides = array<i32>} : memref<16x32xf32, #tpu.memory_space<vmem>>, vector<16x32xf32>,
    return
  }
  func.func @transform_0(%arg0: i32) -> (i32, i32) {
    %c0_i32 = arith.constant 0 : i32
    %c0_i32_0 = arith.constant 0 : i32
    return %arg0, %c0_i32 : i32, i32
  }
  func.func @transform_1(%arg0: i32) -> (i32, i32) {
    %c0_i32 = arith.constant 0 : i32
    %c0_i32_0 = arith.constant 0 : i32
    return %arg0, %c0_i32 : i32, i32
  }
  func.func @transform_2(%arg0: i32) -> (i32, i32) {
    %c0_i32 = arith.constant 0 : i32
    %c0_i32_0 = arith.constant 0 : i32
    %c0_i32_1 = arith.constant 0 : i32
    return %c0_i32, %c0_i32_0 : i32, i32
  }
  func.func @transform_3(%arg0: i32) -> (i32, i32) {
    %c0_i32 = arith.constant 0 : i32
    %c0_i32_0 = arith.constant 0 : i32
    %c0_i32_1 = arith.constant 0 : i32
    return %c0_i32, %c0_i32_0 : i32, i32
  }
  func.func @transform_4(%arg0: i32) -> (i32, i32) {
    %c0_i32 = arith.constant 0 : i32
    %c0_i32_0 = arith.constant 0 : i32
    return %arg0, %c0_i32 : i32, i32
  }
  func.func @transform_5(%arg0: i32) -> (i32, i32) {
    %c0_i32 = arith.constant 0 : i32
    %c0_i32_0 = arith.constant 0 : i32
    return %arg0, %c0_i32 : i32, i32
  }
}

module attributes {stable_mosaic.version = 11 : i64} {
  func.func @_energy_mlp_kernel(%arg0: i32, %arg1: memref<16x32xf32, #tpu.memory_space<vmem>>, %arg2: memref<16x32xf32, #tpu.memory_space<vmem>>, %arg3: memref<32x32xf32, #tpu.memory_space<vmem>>, %arg4: memref<1x32xf32, #tpu.memory_space<vmem>>, %arg5: memref<16x32xf32, #tpu.memory_space<vmem>>, %arg6: memref<16x32xf32, #tpu.memory_space<vmem>>) attributes {dimension_semantics = [#tpu.dimension_semantics<parallel>], iteration_bounds = array<i64: 1>, scalar_prefetch = 0 : i64, scratch_operands = 0 : i64, tpu.core_type = #tpu.core_type<tc>, window_params = [{transform_indices = @transform_0, window_bounds = array<i64: 16, 32>}, {transform_indices = @transform_1, window_bounds = array<i64: 16, 32>}, {pipeline_mode = #tpu.pipeline_mode<synchronous>, transform_indices = @transform_2, window_bounds = array<i64: 32, 32>}, {pipeline_mode = #tpu.pipeline_mode<synchronous>, transform_indices = @transform_3, window_bounds = array<i64: 1, 32>}, {transform_indices = @transform_4, window_bounds = array<i64: 16, 32>}, {transform_indices = @transform_5, window_bounds = array<i64: 16, 32>}]} {
    %c0 = arith.constant 0 : index
    %c0_0 = arith.constant 0 : index
    %0 = vector.load %arg3[%c0, %c0_0] : memref<32x32xf32, #tpu.memory_space<vmem>>, vector<32x32xf32>
    %c0_1 = arith.constant 0 : index
    %c0_2 = arith.constant 0 : index
    %1 = vector.load %arg4[%c0_1, %c0_2] : memref<1x32xf32, #tpu.memory_space<vmem>>, vector<1x32xf32>
    %c0_i32 = arith.constant 0 : i32
    %2 = tpu.assume_multiple %c0_i32, 16 : i32
    %3 = arith.index_cast %2 : i32 to index
    %c0_3 = arith.constant 0 : index
    %4 = vector.load %arg1[%3, %c0_3] : memref<16x32xf32, #tpu.memory_space<vmem>>, vector<16x32xf32>
    %cst = arith.constant dense<0.000000e+00> : vector<16x32xf32>
    %5 = tpu.matmul %4, %0, %cst {dimension_numbers = #tpu.dot_dimension_numbers<[1], [1], [0], [0], [0, 0, 1, 0], [], []>} : vector<16x32xf32>, vector<32x32xf32>, vector<16x32xf32> -> vector<16x32xf32>
    %6 = arith.index_cast %2 : i32 to index
    %c0_4 = arith.constant 0 : index
    %7 = vector.load %arg2[%6, %c0_4] : memref<16x32xf32, #tpu.memory_space<vmem>>, vector<16x32xf32>
    %8 = arith.addf %5, %7 : vector<16x32xf32>
    %9 = vector.broadcast %1 : vector<1x32xf32> to vector<16x32xf32>
    %10 = arith.addf %8, %9 : vector<16x32xf32>
    %11 = math.tanh %10 : vector<16x32xf32>
    %12 = arith.index_cast %2 : i32 to index
    %c0_5 = arith.constant 0 : index
    %13 = vector.load %arg6[%12, %c0_5] : memref<16x32xf32, #tpu.memory_space<vmem>>, vector<16x32xf32>
    tpu.vector_store %arg6[%12, %c0_5], %11 {strides = array<i32>} : memref<16x32xf32, #tpu.memory_space<vmem>>, vector<16x32xf32>,
    %cst_6 = arith.constant dense<0.000000e+00> : vector<16x32xf32>
    %14 = tpu.matmul %11, %0, %cst_6 {dimension_numbers = #tpu.dot_dimension_numbers<[1], [0], [0], [1], [0, 0, 1, 1], [], []>} : vector<16x32xf32>, vector<32x32xf32>, vector<16x32xf32> -> vector<16x32xf32>
    %15 = arith.index_cast %2 : i32 to index
    %c0_7 = arith.constant 0 : index
    %16 = vector.load %arg5[%15, %c0_7] : memref<16x32xf32, #tpu.memory_space<vmem>>, vector<16x32xf32>
    tpu.vector_store %arg5[%15, %c0_7], %14 {strides = array<i32>} : memref<16x32xf32, #tpu.memory_space<vmem>>, vector<16x32xf32>,
    return
  }
  func.func @transform_0(%arg0: i32) -> (i32, i32) {
    %c0_i32 = arith.constant 0 : i32
    %c0_i32_0 = arith.constant 0 : i32
    return %arg0, %c0_i32 : i32, i32
  }
  func.func @transform_1(%arg0: i32) -> (i32, i32) {
    %c0_i32 = arith.constant 0 : i32
    %c0_i32_0 = arith.constant 0 : i32
    return %arg0, %c0_i32 : i32, i32
  }
  func.func @transform_2(%arg0: i32) -> (i32, i32) {
    %c0_i32 = arith.constant 0 : i32
    %c0_i32_0 = arith.constant 0 : i32
    %c0_i32_1 = arith.constant 0 : i32
    return %c0_i32, %c0_i32_0 : i32, i32
  }
  func.func @transform_3(%arg0: i32) -> (i32, i32) {
    %c0_i32 = arith.constant 0 : i32
    %c0_i32_0 = arith.constant 0 : i32
    %c0_i32_1 = arith.constant 0 : i32
    return %c0_i32, %c0_i32_0 : i32, i32
  }
  func.func @transform_4(%arg0: i32) -> (i32, i32) {
    %c0_i32 = arith.constant 0 : i32
    %c0_i32_0 = arith.constant 0 : i32
    return %arg0, %c0_i32 : i32, i32
  }
  func.func @transform_5(%arg0: i32) -> (i32, i32) {
    %c0_i32 = arith.constant 0 : i32
    %c0_i32_0 = arith.constant 0 : i32
    return %arg0, %c0_i32 : i32, i32
  }
}

</mosaic_0001>

<llo_original>
// kernel: energy_mlp.1
$region0: #{energy_mlp.1}
  #allocation0 [shape = 'u32[]', space=smem, size = 0x4, offset = 0x4, fixed_abs, tag = 'smem constant byte address 0x4 - core index']
  #allocation1 [shape = 'u32[144,128]{1,0:T(1,128)}', space=vmem, size = 0x12000, scoped, tag = 'internal scratch']
  %s0 = inlined_call_operand.hbm [shape: f32[16,32], index: 0, kind: input, shape index: {}]
  %s1 = inlined_call_operand.hbm [shape: f32[16,32], index: 1, kind: input, shape index: {}]
  %s2 = inlined_call_operand.hbm [shape: f32[32,32], index: 2, kind: input, shape index: {}]
  %s3 = inlined_call_operand.vmem [shape: f32[1,32], index: 3, kind: input, shape index: {}]
  %s4 = inlined_call_operand.hbm [shape: f32[16,32], index: 4, kind: output, shape index: {0}]
  %s5 = inlined_call_operand.hbm [shape: f32[16,32], index: 5, kind: output, shape index: {1}]
  %6 = xla_tuple %s4, %s5
  %s7 = sld [smem:[#allocation0]]
  $region46: #{energy_mlp.1} parent=0
    _
  %s9 = ssub.s32 1, %s7
  %s10 = scalar_select 0, %s9, %s7
  $region1: #{energy_mlp.1} parent=0
    #allocation2 [shape = 'u8[8192]{0}', space=vmem, size = 0x2000, scoped, tag = 'input window, operand 0, single buffered']
    #allocation3 [shape = 's32[1]{0}', space=sflag, size = 0x4, scoped, tag = 'scoped memory for energy_mlp.1']
    #allocation4 [shape = 's32[1]{0}', space=sflag, size = 0x4, scoped, tag = 'scoped memory for energy_mlp.1']
    #allocation5 [shape = 'u8[8192]{0}', space=vmem, size = 0x2000, scoped, tag = 'input window, operand 1, single buffered']
    #allocation6 [shape = 's32[1]{0}', space=sflag, size = 0x4, scoped, tag = 'scoped memory for energy_mlp.1']
    #allocation7 [shape = 'u8[16384]{0}', space=vmem, size = 0x4000, scoped, tag = 'input window, operand 2, single buffered']
    #allocation8 [shape = 'u8[8192]{0}', space=vmem, size = 0x2000, scoped, tag = 'output window, operand 0, single buffered']
    #allocation9 [shape = 'u8[8192]{0}', space=vmem, size = 0x2000, scoped, tag = 'output window, operand 1, single buffered']
    #allocation10 [shape = 's32[1]{0}', space=sflag, size = 0x4, scoped, tag = 'scoped memory for energy_mlp.1']
    %11 = vsyncpa [#allocation3], 0
    %12 = vsyncpa [#allocation6], 0
    %13 = vsyncpa [#allocation4], 0
    %14 = vsyncpa [#allocation10], 0
    // Predicated region
    $region2: #{energy_mlp.1} parent=1 // pred_check
      _
    $region3: #{energy_mlp.1} parent=1 // pred_check_branch
      %16 = sbr.rel (0) target = $region5
    $region4: #{energy_mlp.1} parent=1 // pred_region
      %s18 = ssub.s32 256, 256
      %19 = vsyncadd [#allocation3], %s18
      %s20 = sshll.u32 [#allocation2], 4
      %s21 = int_to_ptr.vmem [resolvable:$true] %s20
      %26 = dma.hbm_to_vmem [thread:$0]  %s0, 256, %s21, [#allocation3], 128, 128, 8
    $region5: #{energy_mlp.1} parent=1 // pred_fallthru
      _
    // Predicated region
    $region6: #{energy_mlp.1} parent=1 // pred_check
      _
    $region7: #{energy_mlp.1} parent=1 // pred_check_branch
      %28 = sbr.rel (0) target = $region9
    $region8: #{energy_mlp.1} parent=1 // pred_region
      %s30 = ssub.s32 256, 256
      %31 = vsyncadd [#allocation6], %s30
      %s32 = sshll.u32 [#allocation5], 4
      %s33 = int_to_ptr.vmem [resolvable:$true] %s32
      %38 = dma.hbm_to_vmem [thread:$0]  %s1, 256, %s33, [#allocation6], 128, 128, 8
    $region9: #{energy_mlp.1} parent=1 // pred_fallthru
      _
    // Predicated region
    $region10: #{energy_mlp.1} parent=1 // pred_check
      _
    $region11: #{energy_mlp.1} parent=1 // pred_check_branch
      %40 = sbr.rel (0) target = $region13
    $region12: #{energy_mlp.1} parent=1 // pred_region
      %s42 = ssub.s32 512, 512
      %43 = vsyncadd [#allocation6], %s42
      %s44 = sshll.u32 [#allocation7], 4
      %s45 = int_to_ptr.vmem [resolvable:$true] %s44
      %50 = dma.hbm_to_vmem [thread:$0]  %s2, 512, %s45, [#allocation6], 128, 128, 8
    $region13: #{energy_mlp.1} parent=1 // pred_fallthru
      _
    // Predicated region
    $region14: #{energy_mlp.1} parent=1 // pred_check
      _
    $region15: #{energy_mlp.1} parent=1 // pred_check_branch
      %52 = sbr.rel (0) target = $region17
    $region16: #{energy_mlp.1} parent=1 // pred_region
      _
    $region17: #{energy_mlp.1} parent=1 // pred_fallthru
      _
    // Predicated region
    $region18: #{energy_mlp.1} parent=1 // pred_check
      _
    $region19: #{energy_mlp.1} parent=1 // pred_check_branch
      %54 = sbr.rel (0) target = $region21
    $region20: #{energy_mlp.1} parent=1 // pred_region
      %55 = dma.done [#allocation3], 256
    $region21: #{energy_mlp.1} parent=1 // pred_fallthru
      _
    // Predicated region
    $region22: #{energy_mlp.1} parent=1 // pred_check
      _
    $region23: #{energy_mlp.1} parent=1 // pred_check_branch
      %57 = sbr.rel (0) target = $region25
    $region24: #{energy_mlp.1} parent=1 // pred_region
      %58 = dma.done [#allocation6], 256
    $region25: #{energy_mlp.1} parent=1 // pred_fallthru
      _
    // Predicated region
    $region26: #{energy_mlp.1} parent=1 // pred_check
      _
    $region27: #{energy_mlp.1} parent=1 // pred_check_branch
      %60 = sbr.rel (0) target = $region29
    $region28: #{energy_mlp.1} parent=1 // pred_region
      %61 = dma.done [#allocation6], 512
    $region29: #{energy_mlp.1} parent=1 // pred_fallthru
      _
    %v62 = vld [vmem:[#allocation7] sm:$0xff]
    %v63 = vld [vmem:[#allocation7 + $0x8] sm:$0xff]
    %v64 = vld [vmem:[#allocation7 + $0x10] sm:$0xff]
    %v65 = vld [vmem:[#allocation7 + $0x18] sm:$0xff]
    %v66 = vld [vmem:[%s3] sm:$0x1]
    %v67 = vld [vmem:[#allocation2] sm:$0xff]
    %v68 = vld [vmem:[#allocation2 + $0x8] sm:$0xff]
    %v69 = vld [vmem:[#allocation5] sm:$0xff]
    %v70 = vld [vmem:[#allocation5 + $0x8] sm:$0xff]
    %vm71 = vcmask 261120
    %v73 = vsel %vm71, %v67, 0
    %v76 = vsel %vm71, %v68, 0
    %v79 = vsel %vm71, %v62, 0
    %v82 = vsel %vm71, %v63, 0
    %v85 = vsel %vm71, %v64, 0
    %v88 = vsel %vm71, %v65, 0
    %90 = vmatprep.subr.mxu0 0.0
    %91 = vmatpush1.xpose.msra.mxu0 %v79
    %92 = vmatprep.subr.mxu0 0.0
    %93 = vmatpush1.xpose.msra.mxu0 %v82
    %94 = vmatprep.subr.mxu0 0.0
    %95 = vmatpush1.xpose.msra.mxu0 %v85
    %96 = vmatprep.subr.mxu0 0.0
    %97 = vmatpush1.xpose.msra.mxu0 %v88
    %98 = vmatprep.subr.mxu0 0.0
    %99 = vmatpush1.xpose.msra.mxu0 0.0
    %100 = vmatprep.subr.mxu0 0.0
    %101 = vmatpush1.xpose.msra.mxu0 0.0
    %102 = vmatprep.subr.mxu0 0.0
    %103 = vmatpush1.xpose.msra.mxu0 0.0
    %104 = vmatprep.subr.mxu0 0.0
    %105 = vmatpush1.xpose.msra.mxu0 0.0
    %106 = vmatprep.subr.mxu0 0.0
    %107 = vmatpush1.xpose.msra.mxu0 0.0
    %108 = vmatprep.subr.mxu0 0.0
    %109 = vmatpush1.xpose.msra.mxu0 0.0
    %110 = vmatprep.subr.mxu0 0.0
    %111 = vmatpush1.xpose.msra.mxu0 0.0
    %112 = vmatprep.subr.mxu0 0.0
    %113 = vmatpush1.xpose.msra.mxu0 0.0
    %114 = vmatprep.subr.mxu0 0.0
    %115 = vmatpush1.xpose.msra.mxu0 0.0
    %116 = vmatprep.subr.mxu0 0.0
    %117 = vmatpush1.xpose.msra.mxu0 0.0
    %118 = vmatprep.subr.mxu0 0.0
    %119 = vmatpush1.xpose.msra.mxu0 0.0
    %120 = vmatprep.subr.mxu0 0.0
    %121 = vmatpush1.xpose.msra.mxu0 0.0
    %122 = vmatprep.subr.mxu0 0.0
    %123 = vmatpush1.xpose.msra.mxu0 0.0
    %124 = vmatprep.subr.mxu0 0.0
    %125 = vmatpush1.xpose.msra.mxu0 0.0
    %126 = vmatprep.subr.mxu0 0.0
    %127 = vmatpush1.xpose.msra.mxu0 0.0
    %128 = vmatprep.subr.mxu0 0.0
    %129 = vmatpush1.xpose.msra.mxu0 0.0
    %130 = vmatprep.subr.mxu0 0.0
    %131 = vmatpush1.xpose.msra.mxu0 0.0
    %132 = vmatprep.subr.mxu0 0.0
    %133 = vmatpush1.xpose.msra.mxu0 0.0
    %134 = vmatprep.subr.mxu0 0.0
    %135 = vmatpush1.xpose.msra.mxu0 0.0
    %136 = vmatprep.subr.mxu0 0.0
    %137 = vmatpush1.xpose.msra.mxu0 0.0
    %138 = vmatprep.subr.mxu0 0.0
    %139 = vmatpush1.xpose.msra.mxu0 0.0
    %140 = vmatprep.subr.mxu0 0.0
    %141 = vmatpush1.xpose.msra.mxu0 0.0
    %142 = vmatprep.subr.mxu0 0.0
    %143 = vmatpush1.xpose.msra.mxu0 0.0
    %144 = vmatprep.subr.mxu0 0.0
    %145 = vmatpush1.xpose.msra.mxu0 0.0
    %146 = vmatprep.subr.mxu0 0.0
    %147 = vmatpush1.xpose.msra.mxu0 0.0
    %148 = vmatprep.subr.mxu0 0.0
    %149 = vmatpush1.xpose.msra.mxu0 0.0
    %150 = vmatprep.subr.mxu0 0.0
    %151 = vmatpush1.xpose.msra.mxu0 0.0
    %152 = vmatprep.subr.mxu0 0.0
    %153 = vmatpush1.xpose.msra.mxu0 0.0
    %154 = vmatprep.mubr.f32.mxu0 0.0
    %155 = vmatmul.mubr.f32.gmra.mrb[0].mxu0 %v73
    %v156 = vpop.f32.mrb[0].mxu0
    %v157 = vadd.f32 %v69, %v156
    %v158 = vpop.f32.mrb[0].mxu0
    %159 = vmatprep.mubr.f32.mxu0 0.0
    %160 = vmatmul.mubr.f32.gmra.mrb[0].mxu0 %v76
    %v161 = vpop.f32.mrb[0].mxu0
    %v162 = vadd.f32 %v70, %v161
    %v163 = vpop.f32.mrb[0].mxu0
    %164 = vdwg.mxu0
    %v166 = vlaneseq
    %v167 = vshrl.u32 %v166, 7
    %v168 = vsub.s32 0, %v167
    %v169 = vrot.slane %v66, %v168
    %v171 = vadd.f32 %v157, %v169
    %v172 = vadd.f32 %v162, %v169
    %v173 = vtanh.pop %v171
    %v174 = vtanh.pop %v172
    %175 = vst.msk [vmem:[#allocation9] sm:$0xff] %vm71, %v173
    %176 = vst.msk [vmem:[#allocation9 + $0x8] sm:$0xff] %vm71, %v174
    %v178 = vsel %vm71, %v173, 0
    %v181 = vsel %vm71, %v174, 0
    %183 = vmatprep.subr.mxu0 0.0
    %184 = vmatpush1.msra.mxu0 %v62
    %185 = vmatprep.subr.mxu0 0.0
    %186 = vmatpush1.msra.mxu0 %v63
    %187 = vmatprep.subr.mxu0 0.0
    %188 = vmatpush1.msra.mxu0 %v64
    %189 = vmatprep.subr.mxu0 0.0
    %190 = vmatpush1.msra.mxu0 %v65
    %191 = vmatprep.subr.mxu0 0.0
    %192 = vmatpush1.msra.mxu0 0.0
    %193 = vmatprep.subr.mxu0 0.0
    %194 = vmatpush1.msra.mxu0 0.0
    %195 = vmatprep.subr.mxu0 0.0
    %196 = vmatpush1.msra.mxu0 0.0
    %197 = vmatprep.subr.mxu0 0.0
    %198 = vmatpush1.msra.mxu0 0.0
    %199 = vmatprep.subr.mxu0 0.0
    %200 = vmatpush1.msra.mxu0 0.0
    %201 = vmatprep.subr.mxu0 0.0
    %202 = vmatpush1.msra.mxu0 0.0
    %203 = vmatprep.subr.mxu0 0.0
    %204 = vmatpush1.msra.mxu0 0.0
    %205 = vmatprep.subr.mxu0 0.0
    %206 = vmatpush1.msra.mxu0 0.0
    %207 = vmatprep.subr.mxu0 0.0
    %208 = vmatpush1.msra.mxu0 0.0
    %209 = vmatprep.subr.mxu0 0.0
    %210 = vmatpush1.msra.mxu0 0.0
    %211 = vmatprep.subr.mxu0 0.0
    %212 = vmatpush1.msra.mxu0 0.0
    %213 = vmatprep.subr.mxu0 0.0
    %214 = vmatpush1.msra.mxu0 0.0
    %215 = vmatprep.subr.mxu0 0.0
    %216 = vmatpush1.msra.mxu0 0.0
    %217 = vmatprep.subr.mxu0 0.0
    %218 = vmatpush1.msra.mxu0 0.0
    %219 = vmatprep.subr.mxu0 0.0
    %220 = vmatpush1.msra.mxu0 0.0
    %221 = vmatprep.subr.mxu0 0.0
    %222 = vmatpush1.msra.mxu0 0.0
    %223 = vmatprep.subr.mxu0 0.0
    %224 = vmatpush1.msra.mxu0 0.0
    %225 = vmatprep.subr.mxu0 0.0
    %226 = vmatpush1.msra.mxu0 0.0
    %227 = vmatprep.subr.mxu0 0.0
    %228 = vmatpush1.msra.mxu0 0.0
    %229 = vmatprep.subr.mxu0 0.0
    %230 = vmatpush1.msra.mxu0 0.0
    %231 = vmatprep.subr.mxu0 0.0
    %232 = vmatpush1.msra.mxu0 0.0
    %233 = vmatprep.subr.mxu0 0.0
    %234 = vmatpush1.msra.mxu0 0.0
    %235 = vmatprep.subr.mxu0 0.0
    %236 = vmatpush1.msra.mxu0 0.0
    %237 = vmatprep.subr.mxu0 0.0
    %238 = vmatpush1.msra.mxu0 0.0
    %239 = vmatprep.subr.mxu0 0.0
    %240 = vmatpush1.msra.mxu0 0.0
    %241 = vmatprep.subr.mxu0 0.0
    %242 = vmatpush1.msra.mxu0 0.0
    %243 = vmatprep.subr.mxu0 0.0
    %244 = vmatpush1.msra.mxu0 0.0
    %245 = vmatprep.subr.mxu0 0.0
    %246 = vmatpush1.msra.mxu0 0.0
    %247 = vmatprep.mubr.f32.mxu0 0.0
    %248 = vmatmul.mubr.f32.gmra.mrb[0].mxu0 %v178
    %v249 = vpop.f32.mrb[0].mxu0
    %v250 = vadd.f32 0.0, %v249
    %v251 = vpop.f32.mrb[0].mxu0
    %252 = vmatprep.mubr.f32.mxu0 0.0
    %253 = vmatmul.mubr.f32.gmra.mrb[0].mxu0 %v181
    %v254 = vpop.f32.mrb[0].mxu0
    %v255 = vadd.f32 0.0, %v254
    %v256 = vpop.f32.mrb[0].mxu0
    %257 = vdwg.mxu0
    %258 = vst.msk [vmem:[#allocation8] sm:$0xff] %vm71, %v250
    %259 = vst.msk [vmem:[#allocation8 + $0x8] sm:$0xff] %vm71, %v255
    // Predicated region
    $region30: #{energy_mlp.1} parent=1 // pred_check
      _
    $region31: #{energy_mlp.1} parent=1 // pred_check_branch
      %261 = sbr.rel (0) target = $region33
    $region32: #{energy_mlp.1} parent=1 // pred_region
      %s263 = ssub.s32 256, 256
      %264 = vsyncadd [#allocation4], %s263
      %s265 = sshll.u32 [#allocation8], 4
      %s266 = int_to_ptr.vmem [resolvable:$true] %s265
      %271 = dma.vmem_to_hbm [thread:$0]  %s266, 256, %s4, [#allocation4], 128, 128, 8
    $region33: #{energy_mlp.1} parent=1 // pred_fallthru
      _
    // Predicated region
    $region34: #{energy_mlp.1} parent=1 // pred_check
      _
    $region35: #{energy_mlp.1} parent=1 // pred_check_branch
      %273 = sbr.rel (0) target = $region37
    $region36: #{energy_mlp.1} parent=1 // pred_region
      %s275 = ssub.s32 256, 256
      %276 = vsyncadd [#allocation10], %s275
      %s277 = sshll.u32 [#allocation9], 4
      %s278 = int_to_ptr.vmem [resolvable:$true] %s277
      %283 = dma.vmem_to_hbm [thread:$0]  %s278, 256, %s5, [#allocation10], 128, 128, 8
    $region37: #{energy_mlp.1} parent=1 // pred_fallthru
      _
    // Predicated region
    $region38: #{energy_mlp.1} parent=1 // pred_check
      _
    $region39: #{energy_mlp.1} parent=1 // pred_check_branch
      %285 = sbr.rel (0) target = $region41
    $region40: #{energy_mlp.1} parent=1 // pred_region
      %286 = dma.done [#allocation4], 256
    $region41: #{energy_mlp.1} parent=1 // pred_fallthru
      _
    // Predicated region
    $region42: #{energy_mlp.1} parent=1 // pred_check
      _
    $region43: #{energy_mlp.1} parent=1 // pred_check_branch
      %288 = sbr.rel (0) target = $region45
    $region44: #{energy_mlp.1} parent=1 // pred_region
      %289 = dma.done [#allocation10], 256
    $region45: #{energy_mlp.1} parent=1 // pred_fallthru
      _
    %290 = vsyncpa [#allocation3], 1
    %291 = vsyncpa [#allocation6], 1
    %292 = vsyncpa [#allocation4], 1
    %293 = vsyncpa [#allocation10], 1

// kernel: energy_mlp.1
$region0: #{energy_mlp.1}
  #allocation0 [shape = 'u32[]', space=smem, size = 0x4, offset = 0x4, fixed_abs, tag = 'smem constant byte address 0x4 - core index']
  #allocation1 [shape = 'u32[144,128]{1,0:T(1,128)}', space=vmem, size = 0x12000, scoped, tag = 'internal scratch']
  %s0 = inlined_call_operand.hbm [shape: f32[16,32], index: 0, kind: input, shape index: {}]
  %s1 = inlined_call_operand.hbm [shape: f32[16,32], index: 1, kind: input, shape index: {}]
  %s2 = inlined_call_operand.hbm [shape: f32[32,32], index: 2, kind: input, shape index: {}]
  %s3 = inlined_call_operand.vmem [shape: f32[1,32], index: 3, kind: input, shape index: {}]
  %s4 = inlined_call_operand.hbm [shape: f32[16,32], index: 4, kind: output, shape index: {0}]
  %s5 = inlined_call_operand.hbm [shape: f32[16,32], index: 5, kind: output, shape index: {1}]
  %6 = xla_tuple %s4, %s5
  %s7 = sld [smem:[#allocation0]]
  $region46: #{energy_mlp.1} parent=0
    _
  %s9 = ssub.s32 1, %s7
  %s10 = scalar_select 0, %s9, %s7
  $region1: #{energy_mlp.1} parent=0
    #allocation2 [shape = 'u8[8192]{0}', space=vmem, size = 0x2000, scoped, tag = 'input window, operand 0, single buffered']
    #allocation3 [shape = 's32[1]{0}', space=sflag, size = 0x4, scoped, tag = 'scoped memory for energy_mlp.1']
    #allocation4 [shape = 's32[1]{0}', space=sflag, size = 0x4, scoped, tag = 'scoped memory for energy_mlp.1']
    #allocation5 [shape = 'u8[8192]{0}', space=vmem, size = 0x2000, scoped, tag = 'input window, operand 1, single buffered']
    #allocation6 [shape = 's32[1]{0}', space=sflag, size = 0x4, scoped, tag = 'scoped memory for energy_mlp.1']
    #allocation7 [shape = 'u8[16384]{0}', space=vmem, size = 0x4000, scoped, tag = 'input window, operand 2, single buffered']
    #allocation8 [shape = 'u8[8192]{0}', space=vmem, size = 0x2000, scoped, tag = 'output window, operand 0, single buffered']
    #allocation9 [shape = 'u8[8192]{0}', space=vmem, size = 0x2000, scoped, tag = 'output window, operand 1, single buffered']
    #allocation10 [shape = 's32[1]{0}', space=sflag, size = 0x4, scoped, tag = 'scoped memory for energy_mlp.1']
    %11 = vsyncpa [#allocation3], 0
    %12 = vsyncpa [#allocation6], 0
    %13 = vsyncpa [#allocation4], 0
    %14 = vsyncpa [#allocation10], 0
    // Predicated region
    $region2: #{energy_mlp.1} parent=1 // pred_check
      _
    $region3: #{energy_mlp.1} parent=1 // pred_check_branch
      %16 = sbr.rel (0) target = $region5
    $region4: #{energy_mlp.1} parent=1 // pred_region
      %s18 = ssub.s32 256, 256
      %19 = vsyncadd [#allocation3], %s18
      %s20 = sshll.u32 [#allocation2], 4
      %s21 = int_to_ptr.vmem [resolvable:$true] %s20
      %26 = dma.hbm_to_vmem [thread:$0]  %s0, 256, %s21, [#allocation3], 128, 128, 8
    $region5: #{energy_mlp.1} parent=1 // pred_fallthru
      _
    // Predicated region
    $region6: #{energy_mlp.1} parent=1 // pred_check
      _
    $region7: #{energy_mlp.1} parent=1 // pred_check_branch
      %28 = sbr.rel (0) target = $region9
    $region8: #{energy_mlp.1} parent=1 // pred_region
      %s30 = ssub.s32 256, 256
      %31 = vsyncadd [#allocation6], %s30
      %s32 = sshll.u32 [#allocation5], 4
      %s33 = int_to_ptr.vmem [resolvable:$true] %s32
      %38 = dma.hbm_to_vmem [thread:$0]  %s1, 256, %s33, [#allocation6], 128, 128, 8
    $region9: #{energy_mlp.1} parent=1 // pred_fallthru
      _
    // Predicated region
    $region10: #{energy_mlp.1} parent=1 // pred_check
      _
    $region11: #{energy_mlp.1} parent=1 // pred_check_branch
      %40 = sbr.rel (0) target = $region13
    $region12: #{energy_mlp.1} parent=1 // pred_region
      %s42 = ssub.s32 512, 512
      %43 = vsyncadd [#allocation6], %s42
      %s44 = sshll.u32 [#allocation7], 4
      %s45 = int_to_ptr.vmem [resolvable:$true] %s44
      %50 = dma.hbm_to_vmem [thread:$0]  %s2, 512, %s45, [#allocation6], 128, 128, 8
    $region13: #{energy_mlp.1} parent=1 // pred_fallthru
      _
    // Predicated region
    $region14: #{energy_mlp.1} parent=1 // pred_check
      _
    $region15: #{energy_mlp.1} parent=1 // pred_check_branch
      %52 = sbr.rel (0) target = $region17
    $region16: #{energy_mlp.1} parent=1 // pred_region
      _
    $region17: #{energy_mlp.1} parent=1 // pred_fallthru
      _
    // Predicated region
    $region18: #{energy_mlp.1} parent=1 // pred_check
      _
    $region19: #{energy_mlp.1} parent=1 // pred_check_branch
      %54 = sbr.rel (0) target = $region21
    $region20: #{energy_mlp.1} parent=1 // pred_region
      %55 = dma.done [#allocation3], 256
    $region21: #{energy_mlp.1} parent=1 // pred_fallthru
      _
    // Predicated region
    $region22: #{energy_mlp.1} parent=1 // pred_check
      _
    $region23: #{energy_mlp.1} parent=1 // pred_check_branch
      %57 = sbr.rel (0) target = $region25
    $region24: #{energy_mlp.1} parent=1 // pred_region
      %58 = dma.done [#allocation6], 256
    $region25: #{energy_mlp.1} parent=1 // pred_fallthru
      _
    // Predicated region
    $region26: #{energy_mlp.1} parent=1 // pred_check
      _
    $region27: #{energy_mlp.1} parent=1 // pred_check_branch
      %60 = sbr.rel (0) target = $region29
    $region28: #{energy_mlp.1} parent=1 // pred_region
      %61 = dma.done [#allocation6], 512
    $region29: #{energy_mlp.1} parent=1 // pred_fallthru
      _
    %v62 = vld [vmem:[#allocation7] sm:$0xff]
    %v63 = vld [vmem:[#allocation7 + $0x8] sm:$0xff]
    %v64 = vld [vmem:[#allocation7 + $0x10] sm:$0xff]
    %v65 = vld [vmem:[#allocation7 + $0x18] sm:$0xff]
    %v66 = vld [vmem:[%s3] sm:$0x1]
    %v67 = vld [vmem:[#allocation2] sm:$0xff]
    %v68 = vld [vmem:[#allocation2 + $0x8] sm:$0xff]
    %v69 = vld [vmem:[#allocation5] sm:$0xff]
    %v70 = vld [vmem:[#allocation5 + $0x8] sm:$0xff]
    %vm71 = vcmask 261120
    %v73 = vsel %vm71, %v67, 0
    %v76 = vsel %vm71, %v68, 0
    %v79 = vsel %vm71, %v62, 0
    %v82 = vsel %vm71, %v63, 0
    %v85 = vsel %vm71, %v64, 0
    %v88 = vsel %vm71, %v65, 0
    %90 = vmatprep.subr.mxu0 0.0
    %91 = vmatpush1.xpose.msra.mxu0 %v79
    %92 = vmatprep.subr.mxu0 0.0
    %93 = vmatpush1.xpose.msra.mxu0 %v82
    %94 = vmatprep.subr.mxu0 0.0
    %95 = vmatpush1.xpose.msra.mxu0 %v85
    %96 = vmatprep.subr.mxu0 0.0
    %97 = vmatpush1.xpose.msra.mxu0 %v88
    %98 = vmatprep.subr.mxu0 0.0
    %99 = vmatpush1.xpose.msra.mxu0 0.0
    %100 = vmatprep.subr.mxu0 0.0
    %101 = vmatpush1.xpose.msra.mxu0 0.0
    %102 = vmatprep.subr.mxu0 0.0
    %103 = vmatpush1.xpose.msra.mxu0 0.0
    %104 = vmatprep.subr.mxu0 0.0
    %105 = vmatpush1.xpose.msra.mxu0 0.0
    %106 = vmatprep.subr.mxu0 0.0
    %107 = vmatpush1.xpose.msra.mxu0 0.0
    %108 = vmatprep.subr.mxu0 0.0
    %109 = vmatpush1.xpose.msra.mxu0 0.0
    %110 = vmatprep.subr.mxu0 0.0
    %111 = vmatpush1.xpose.msra.mxu0 0.0
    %112 = vmatprep.subr.mxu0 0.0
    %113 = vmatpush1.xpose.msra.mxu0 0.0
    %114 = vmatprep.subr.mxu0 0.0
    %115 = vmatpush1.xpose.msra.mxu0 0.0
    %116 = vmatprep.subr.mxu0 0.0
    %117 = vmatpush1.xpose.msra.mxu0 0.0
    %118 = vmatprep.subr.mxu0 0.0
    %119 = vmatpush1.xpose.msra.mxu0 0.0
    %120 = vmatprep.subr.mxu0 0.0
    %121 = vmatpush1.xpose.msra.mxu0 0.0
    %122 = vmatprep.subr.mxu0 0.0
    %123 = vmatpush1.xpose.msra.mxu0 0.0
    %124 = vmatprep.subr.mxu0 0.0
    %125 = vmatpush1.xpose.msra.mxu0 0.0
    %126 = vmatprep.subr.mxu0 0.0
    %127 = vmatpush1.xpose.msra.mxu0 0.0
    %128 = vmatprep.subr.mxu0 0.0
    %129 = vmatpush1.xpose.msra.mxu0 0.0
    %130 = vmatprep.subr.mxu0 0.0
    %131 = vmatpush1.xpose.msra.mxu0 0.0
    %132 = vmatprep.subr.mxu0 0.0
    %133 = vmatpush1.xpose.msra.mxu0 0.0
    %134 = vmatprep.subr.mxu0 0.0
    %135 = vmatpush1.xpose.msra.mxu0 0.0
    %136 = vmatprep.subr.mxu0 0.0
    %137 = vmatpush1.xpose.msra.mxu0 0.0
    %138 = vmatprep.subr.mxu0 0.0
    %139 = vmatpush1.xpose.msra.mxu0 0.0
    %140 = vmatprep.subr.mxu0 0.0
    %141 = vmatpush1.xpose.msra.mxu0 0.0
    %142 = vmatprep.subr.mxu0 0.0
    %143 = vmatpush1.xpose.msra.mxu0 0.0
    %144 = vmatprep.subr.mxu0 0.0
    %145 = vmatpush1.xpose.msra.mxu0 0.0
    %146 = vmatprep.subr.mxu0 0.0
    %147 = vmatpush1.xpose.msra.mxu0 0.0
    %148 = vmatprep.subr.mxu0 0.0
    %149 = vmatpush1.xpose.msra.mxu0 0.0
    %150 = vmatprep.subr.mxu0 0.0
    %151 = vmatpush1.xpose.msra.mxu0 0.0
    %152 = vmatprep.subr.mxu0 0.0
    %153 = vmatpush1.xpose.msra.mxu0 0.0
    %154 = vmatprep.mubr.f32.mxu0 0.0
    %155 = vmatmul.mubr.f32.gmra.mrb[0].mxu0 %v73
    %v156 = vpop.f32.mrb[0].mxu0
    %v157 = vadd.f32 %v69, %v156
    %v158 = vpop.f32.mrb[0].mxu0
    %159 = vmatprep.mubr.f32.mxu0 0.0
    %160 = vmatmul.mubr.f32.gmra.mrb[0].mxu0 %v76
    %v161 = vpop.f32.mrb[0].mxu0
    %v162 = vadd.f32 %v70, %v161
    %v163 = vpop.f32.mrb[0].mxu0
    %164 = vdwg.mxu0
    %v166 = vlaneseq
    %v167 = vshrl.u32 %v166, 7
    %v168 = vsub.s32 0, %v167
    %v169 = vrot.slane %v66, %v168
    %v171 = vadd.f32 %v157, %v169
    %v172 = vadd.f32 %v162, %v169
    %v173 = vtanh.pop %v171
    %v174 = vtanh.pop %v172
    %175 = vst.msk [vmem:[#allocation9] sm:$0xff] %vm71, %v173
    %176 = vst.msk [vmem:[#allocation9 + $0x8] sm:$0xff] %vm71, %v174
    %v178 = vsel %vm71, %v173, 0
    %v181 = vsel %vm71, %v174, 0
    %183 = vmatprep.subr.mxu0 0.0
    %184 = vmatpush1.msra.mxu0 %v62
    %185 = vmatprep.subr.mxu0 0.0
    %186 = vmatpush1.msra.mxu0 %v63
    %187 = vmatprep.subr.mxu0 0.0
    %188 = vmatpush1.msra.mxu0 %v64
    %189 = vmatprep.subr.mxu0 0.0
    %190 = vmatpush1.msra.mxu0 %v65
    %191 = vmatprep.subr.mxu0 0.0
    %192 = vmatpush1.msra.mxu0 0.0
    %193 = vmatprep.subr.mxu0 0.0
    %194 = vmatpush1.msra.mxu0 0.0
    %195 = vmatprep.subr.mxu0 0.0
    %196 = vmatpush1.msra.mxu0 0.0
    %197 = vmatprep.subr.mxu0 0.0
    %198 = vmatpush1.msra.mxu0 0.0
    %199 = vmatprep.subr.mxu0 0.0
    %200 = vmatpush1.msra.mxu0 0.0
    %201 = vmatprep.subr.mxu0 0.0
    %202 = vmatpush1.msra.mxu0 0.0
    %203 = vmatprep.subr.mxu0 0.0
    %204 = vmatpush1.msra.mxu0 0.0
    %205 = vmatprep.subr.mxu0 0.0
    %206 = vmatpush1.msra.mxu0 0.0
    %207 = vmatprep.subr.mxu0 0.0
    %208 = vmatpush1.msra.mxu0 0.0
    %209 = vmatprep.subr.mxu0 0.0
    %210 = vmatpush1.msra.mxu0 0.0
    %211 = vmatprep.subr.mxu0 0.0
    %212 = vmatpush1.msra.mxu0 0.0
    %213 = vmatprep.subr.mxu0 0.0
    %214 = vmatpush1.msra.mxu0 0.0
    %215 = vmatprep.subr.mxu0 0.0
    %216 = vmatpush1.msra.mxu0 0.0
    %217 = vmatprep.subr.mxu0 0.0
    %218 = vmatpush1.msra.mxu0 0.0
    %219 = vmatprep.subr.mxu0 0.0
    %220 = vmatpush1.msra.mxu0 0.0
    %221 = vmatprep.subr.mxu0 0.0
    %222 = vmatpush1.msra.mxu0 0.0
    %223 = vmatprep.subr.mxu0 0.0
    %224 = vmatpush1.msra.mxu0 0.0
    %225 = vmatprep.subr.mxu0 0.0
    %226 = vmatpush1.msra.mxu0 0.0
    %227 = vmatprep.subr.mxu0 0.0
    %228 = vmatpush1.msra.mxu0 0.0
    %229 = vmatprep.subr.mxu0 0.0
    %230 = vmatpush1.msra.mxu0 0.0
    %231 = vmatprep.subr.mxu0 0.0
    %232 = vmatpush1.msra.mxu0 0.0
    %233 = vmatprep.subr.mxu0 0.0
    %234 = vmatpush1.msra.mxu0 0.0
    %235 = vmatprep.subr.mxu0 0.0
    %236 = vmatpush1.msra.mxu0 0.0
    %237 = vmatprep.subr.mxu0 0.0
    %238 = vmatpush1.msra.mxu0 0.0
    %239 = vmatprep.subr.mxu0 0.0
    %240 = vmatpush1.msra.mxu0 0.0
    %241 = vmatprep.subr.mxu0 0.0
    %242 = vmatpush1.msra.mxu0 0.0
    %243 = vmatprep.subr.mxu0 0.0
    %244 = vmatpush1.msra.mxu0 0.0
    %245 = vmatprep.subr.mxu0 0.0
    %246 = vmatpush1.msra.mxu0 0.0
    %247 = vmatprep.mubr.f32.mxu0 0.0
    %248 = vmatmul.mubr.f32.gmra.mrb[0].mxu0 %v178
    %v249 = vpop.f32.mrb[0].mxu0
    %v250 = vadd.f32 0.0, %v249
    %v251 = vpop.f32.mrb[0].mxu0
    %252 = vmatprep.mubr.f32.mxu0 0.0
    %253 = vmatmul.mubr.f32.gmra.mrb[0].mxu0 %v181
    %v254 = vpop.f32.mrb[0].mxu0
    %v255 = vadd.f32 0.0, %v254
    %v256 = vpop.f32.mrb[0].mxu0
    %257 = vdwg.mxu0
    %258 = vst.msk [vmem:[#allocation8] sm:$0xff] %vm71, %v250
    %259 = vst.msk [vmem:[#allocation8 + $0x8] sm:$0xff] %vm71, %v255
    // Predicated region
    $region30: #{energy_mlp.1} parent=1 // pred_check
      _
    $region31: #{energy_mlp.1} parent=1 // pred_check_branch
      %261 = sbr.rel (0) target = $region33
    $region32: #{energy_mlp.1} parent=1 // pred_region
      %s263 = ssub.s32 256, 256
      %264 = vsyncadd [#allocation4], %s263
      %s265 = sshll.u32 [#allocation8], 4
      %s266 = int_to_ptr.vmem [resolvable:$true] %s265
      %271 = dma.vmem_to_hbm [thread:$0]  %s266, 256, %s4, [#allocation4], 128, 128, 8
    $region33: #{energy_mlp.1} parent=1 // pred_fallthru
      _
    // Predicated region
    $region34: #{energy_mlp.1} parent=1 // pred_check
      _
    $region35: #{energy_mlp.1} parent=1 // pred_check_branch
      %273 = sbr.rel (0) target = $region37
    $region36: #{energy_mlp.1} parent=1 // pred_region
      %s275 = ssub.s32 256, 256
      %276 = vsyncadd [#allocation10], %s275
      %s277 = sshll.u32 [#allocation9], 4
      %s278 = int_to_ptr.vmem [resolvable:$true] %s277
      %283 = dma.vmem_to_hbm [thread:$0]  %s278, 256, %s5, [#allocation10], 128, 128, 8
    $region37: #{energy_mlp.1} parent=1 // pred_fallthru
      _
    // Predicated region
    $region38: #{energy_mlp.1} parent=1 // pred_check
      _
    $region39: #{energy_mlp.1} parent=1 // pred_check_branch
      %285 = sbr.rel (0) target = $region41
    $region40: #{energy_mlp.1} parent=1 // pred_region
      %286 = dma.done [#allocation4], 256
    $region41: #{energy_mlp.1} parent=1 // pred_fallthru
      _
    // Predicated region
    $region42: #{energy_mlp.1} parent=1 // pred_check
      _
    $region43: #{energy_mlp.1} parent=1 // pred_check_branch
      %288 = sbr.rel (0) target = $region45
    $region44: #{energy_mlp.1} parent=1 // pred_region
      %289 = dma.done [#allocation10], 256
    $region45: #{energy_mlp.1} parent=1 // pred_fallthru
      _
    %290 = vsyncpa [#allocation3], 1
    %291 = vsyncpa [#allocation6], 1
    %292 = vsyncpa [#allocation4], 1
    %293 = vsyncpa [#allocation10], 1

</llo_original>
